<compile_context>
chip_gen: v7x
topology: tpu7x:2x2x1
jax: 0.10.0
libtpu: 0.0.40
codegen_flags: <defaults>
</compile_context>

<pallas_src>
import functools

import jax
import jax.numpy as jnp
from jax.experimental import pallas as pl
from jax.experimental.pallas import tpu as pltpu

IN_FEATURES = 440
OUT_FEATURES = 1000
OUT_PADDED = 1024          # next multiple of 128 -> lane-dense stores, exact N grid
TN = 256                   # N tile (multiple of 128; good for v6e/v7x, fine on v5e)
TM_MAX = 128               # M tile used when batch is large


def prepare_linear_params(weight, bias):
    """One-time parameter prep (do NOT call per forward).

    weight: (OUT_FEATURES, IN_FEATURES) f32 (PyTorch layout)
    bias:   (OUT_FEATURES,) f32
    Returns (w_t_padded (440, 1024), bias_padded (1, 1024)).
    """
    w_t = jnp.transpose(weight).astype(jnp.float32)                  # (440, 1000)
    w_t = jnp.pad(w_t, ((0, 0), (0, OUT_PADDED - OUT_FEATURES)))     # (440, 1024)
    b = jnp.pad(bias.astype(jnp.float32), (0, OUT_PADDED - OUT_FEATURES))
    return w_t, b.reshape(1, OUT_PADDED)


def linear_kernel(x_ref, w_ref, b_ref, o_ref):
    # x_ref: (TM, 440), w_ref: (440, TN), b_ref: (1, TN), o_ref: (TM, TN)
    acc = jnp.dot(x_ref[...], w_ref[...], preferred_element_type=jnp.float32)
    o_ref[...] = (acc + b_ref[...]).astype(o_ref.dtype)


@functools.partial(jax.jit, static_argnames=())
def linear_pallas(x, w_t_padded, b_padded):
    """x: (B, 440) f32; w_t_padded: (440, 1024) f32; b_padded: (1, 1024) f32.

    Returns (B, 1000) f32 equal to x @ W.T + b (torch.nn.Linear semantics).
    """
    B = x.shape[0]

    # Choose M tiling: whole batch as one tile when small, else 128-row tiles.
    if B <= TM_MAX:
        TM = B
        B_pad = B
        x_pad = x
    else:
        TM = TM_MAX
        B_pad = ((B + TM - 1) // TM) * TM
        x_pad = jnp.pad(x, ((0, B_pad - B), (0, 0)))

    grid = (B_pad // TM, OUT_PADDED // TN)

    cost = pl.CostEstimate(
        flops=2 * B_pad * IN_FEATURES * OUT_PADDED,
        bytes_accessed=4 * (B_pad * IN_FEATURES
                            + IN_FEATURES * OUT_PADDED
                            + B_pad * OUT_PADDED),
        transcendentals=0,
    )

    out = pl.pallas_call(
        linear_kernel,
        out_shape=jax.ShapeDtypeStruct((B_pad, OUT_PADDED), jnp.float32),
        grid_spec=pltpu.PrefetchScalarGridSpec(
            num_scalar_prefetch=0,
            grid=grid,
            in_specs=[
                pl.BlockSpec((TM, IN_FEATURES), lambda i, j: (i, 0)),
                pl.BlockSpec((IN_FEATURES, TN), lambda i, j: (0, j)),
                pl.BlockSpec((1, TN), lambda i, j: (0, j)),
            ],
            out_specs=pl.BlockSpec((TM, TN), lambda i, j: (i, j)),
        ),
        compiler_params=pltpu.CompilerParams(
            dimension_semantics=("parallel", "parallel"),
        ),
        cost_estimate=cost,
    )(x_pad, w_t_padded, b_padded)

    return out[:B, :OUT_FEATURES]


if __name__ == "__main__":
    key = jax.random.PRNGKey(0)
    kx, kw, kb = jax.random.split(key, 3)

    # Deterministic synthetic parameters (shapes from Linear(440, 1000, bias=True)).
    x = jax.random.normal(kx, (1, IN_FEATURES), dtype=jnp.float32)
    bound = 1.0 / (IN_FEATURES ** 0.5)
    weight = jax.random.uniform(
        kw, (OUT_FEATURES, IN_FEATURES), dtype=jnp.float32, minval=-bound, maxval=bound
    )
    bias = jax.random.uniform(
        kb, (OUT_FEATURES,), dtype=jnp.float32, minval=-bound, maxval=bound
    )

    # One-time parameter prep (transpose + pad), outside the per-call path.
    w_t_padded, b_padded = prepare_linear_params(weight, bias)
    w_t_padded = jax.block_until_ready(w_t_padded)
    b_padded = jax.block_until_ready(b_padded)

    out = linear_pallas(x, w_t_padded, b_padded)
    out = jax.block_until_ready(out)

    # Cross-check against plain JAX reference of the same math.
    ref = x @ weight.T + bias
    assert out.shape == (1, OUT_FEATURES)
    assert jnp.allclose(out, ref, atol=1e-4, rtol=1e-4)

    print("KERNEL_OK")
</pallas_src>

<mosaic_0001>
module attributes {stable_mosaic.version = 11 : i64} {
  func.func @linear_kernel(%arg0: i32, %arg1: i32, %arg2: memref<1x440xf32, #tpu.memory_space<vmem>>, %arg3: memref<440x256xf32, #tpu.memory_space<vmem>>, %arg4: memref<1x256xf32, #tpu.memory_space<vmem>>, %arg5: memref<1x256xf32, #tpu.memory_space<vmem>>) attributes {dimension_semantics = [#tpu.dimension_semantics<parallel>, #tpu.dimension_semantics<parallel>], iteration_bounds = array<i64: 1, 4>, scalar_prefetch = 0 : i64, scratch_operands = 0 : i64, tpu.core_type = #tpu.core_type<tc>, window_params = [{transform_indices = @transform_0, window_bounds = array<i64: 1, 440>}, {transform_indices = @transform_1, window_bounds = array<i64: 440, 256>}, {transform_indices = @transform_2, window_bounds = array<i64: 1, 256>}, {transform_indices = @transform_3, window_bounds = array<i64: 1, 256>}]} {
    %c0 = arith.constant 0 : index
    %c0_0 = arith.constant 0 : index
    %0 = vector.load %arg2[%c0, %c0_0] : memref<1x440xf32, #tpu.memory_space<vmem>>, vector<1x440xf32>
    %c0_1 = arith.constant 0 : index
    %c0_2 = arith.constant 0 : index
    %1 = vector.load %arg3[%c0_1, %c0_2] : memref<440x256xf32, #tpu.memory_space<vmem>>, vector<440x256xf32>
    %cst = arith.constant dense<0.000000e+00> : vector<1x256xf32>
    %2 = tpu.matmul %0, %1, %cst {dimension_numbers = #tpu.dot_dimension_numbers<[1], [0], [0], [1], [0, 0, 1, 1], [], []>} : vector<1x440xf32>, vector<440x256xf32>, vector<1x256xf32> -> vector<1x256xf32>
    %c0_3 = arith.constant 0 : index
    %c0_4 = arith.constant 0 : index
    %3 = vector.load %arg4[%c0_3, %c0_4] : memref<1x256xf32, #tpu.memory_space<vmem>>, vector<1x256xf32>
    %4 = arith.addf %2, %3 : vector<1x256xf32>
    %c0_5 = arith.constant 0 : index
    %c0_6 = arith.constant 0 : index
    %5 = vector.load %arg5[%c0_5, %c0_6] : memref<1x256xf32, #tpu.memory_space<vmem>>, vector<1x256xf32>
    tpu.vector_store %arg5[%c0_5, %c0_6], %4 {strides = array<i32>} : memref<1x256xf32, #tpu.memory_space<vmem>>, vector<1x256xf32>,
    return
  }
  func.func @transform_0(%arg0: i32, %arg1: i32) -> (i32, i32) {
    %c0_i32 = arith.constant 0 : i32
    %c0_i32_0 = arith.constant 0 : i32
    return %arg0, %c0_i32 : i32, i32
  }
  func.func @transform_1(%arg0: i32, %arg1: i32) -> (i32, i32) {
    %c0_i32 = arith.constant 0 : i32
    %c0_i32_0 = arith.constant 0 : i32
    return %c0_i32, %arg1 : i32, i32
  }
  func.func @transform_2(%arg0: i32, %arg1: i32) -> (i32, i32) {
    %c0_i32 = arith.constant 0 : i32
    %c0_i32_0 = arith.constant 0 : i32
    return %c0_i32, %arg1 : i32, i32
  }
  func.func @transform_3(%arg0: i32, %arg1: i32) -> (i32, i32) {
    %c0_i32 = arith.constant 0 : i32
    return %arg0, %arg1 : i32, i32
  }
}

</mosaic_0001>

<llo_original>
// kernel: linear_pallas.1
$region0: #{linear_pallas.1}
  #allocation0 [shape = 'u32[]', space=smem, size = 0x4, offset = 0x4, fixed_abs, tag = 'smem constant byte address 0x4 - core index']
  #allocation1 [shape = 'u32[144,128]{1,0:T(1,128)}', space=vmem, size = 0x12000, scoped, tag = 'internal scratch']
  %s0 = inlined_call_operand.hbm [shape: f32[1,440], index: 0, kind: input, shape index: {}]
  %s1 = inlined_call_operand.hbm [shape: f32[440,1024], index: 1, kind: input, shape index: {}]
  %s2 = inlined_call_operand.hbm [shape: f32[1,1024], index: 2, kind: input, shape index: {}]
  %s3 = inlined_call_operand.hbm [shape: f32[1,1024], index: 3, kind: output, shape index: {}]
  %s4 = sld [smem:[#allocation0]]
  $region57: #{linear_pallas.1} parent=0
    _
  %s6 = ssub.s32 1, %s4
  %s7 = scalar_select 0, %s6, %s4
  $region1: #{linear_pallas.1} parent=0
    #allocation2 [shape = 'u8[2048]{0}', space=vmem, size = 0x800, scoped, tag = 'input window, operand 0, single buffered']
    #allocation3 [shape = 's32[2]{0}', space=sflag, size = 0x8, scoped, tag = 'scoped memory for linear_pallas.1']
    #allocation4 [shape = 's32[2]{0}', space=sflag, size = 0x8, scoped, tag = 'scoped memory for linear_pallas.1']
    #allocation5 [shape = 'u8[901120]{0}', space=vmem, size = 0xdc000, scoped, tag = 'input window, operand 1']
    #allocation6 [shape = 's32[2]{0}', space=sflag, size = 0x8, scoped, tag = 'scoped memory for linear_pallas.1']
    #allocation7 [shape = 'u8[2048]{0}', space=vmem, size = 0x800, scoped, tag = 'input window, operand 2']
    #allocation8 [shape = 'u8[2048]{0}', space=vmem, size = 0x800, scoped, tag = 'output window, operand 0']
    %8 = vsyncpa [#allocation3], 0
    %9 = vsyncpa [#allocation6], 0
    %s10 = scalar_lea.sflag [#allocation6], 1
    %11 = vsyncpa %s10, 0
    %12 = vsyncpa [#allocation4], 0
    %s13 = scalar_lea.sflag [#allocation4], 1
    %14 = vsyncpa %s13, 0
    loop: start=0, step=1, limit=6
    $region2: #{linear_pallas.1} parent=1 // loop_pre_header
      _
    $region3: #{linear_pallas.1} parent=1 // loop_header
      %s16 = sphi 0, %s20
      %p17 = scmp.ge.s32.totalorder %s16, 6
      %s23 = sphi 0, %s35
      %s24 = sphi 0, %s31
      %s25 = sphi 0, %s23
      %s26 = sphi 0, %s24
      %s27 = sphi 0, %s25
      %s28 = sphi 0, %s26
      %s38 = sphi 0, %s40
      %s41 = sphi 0, %s38
      %s42 = sphi 0, %s41
      %s58 = sphi 0, %s42
      %s64 = sphi 0, %s66
      %s67 = sphi 0, %s64
      %s68 = sphi 0, %s67
      %s84 = sphi 0, %s68
      %s90 = sphi 0, %s92
      %s93 = sphi 0, %s90
      %s94 = sphi 0, %s93
      %s110 = sphi 0, %s94
      %s118 = sphi 0, %s120
      %s121 = sphi 0, %s118
      %s122 = sphi 0, %s121
      %s138 = sphi 0, %s122
    $region4: #{linear_pallas.1} parent=1 // loop_header_branch
      %19 = sbr.rel (%p17) target = $region8
    $region5: #{linear_pallas.1} parent=1 // loop_body
      %s21 = ssub.s32 %s16, 1
      %s22 = ssub.s32 %s16, 2
      %s29 = sadd.s32 1, %s24
      %p30 = scmp.ge.s32.totalorder %s29, 4
      %s31 = scalar_select %p30, 0, %s29
      %s32 = sadd.s32 1, %s23
      %s33 = scalar_select %p30, %s32, %s23
      %p34 = scmp.ge.s32.totalorder %s33, 1
      %s35 = scalar_select %p34, 0, %s33
      %s36 = ssub.s32 %s23, %s35
      %p37 = scmp.eq.s32.totalorder %s36, 0
      %s39 = sadd.s32 %s38, 1
      %s40 = scalar_select %p37, %s38, %s39
      %p43 = pneg %p37
      %p44 = scmp.eq.s32.totalorder %s16, 3
      %p45 = por %p43, %p44
      %p46 = scmp.ne.s32.totalorder %s38, %s41
      %p47 = scmp.eq.s32.totalorder %s16, 0
      %p48 = por %p46, %p47
      %p49 = scmp.ne.s32.totalorder %s38, %s41
      %p50 = scmp.eq.s32.totalorder %s21, 3
      %p51 = por %p49, %p50
      %p52 = scmp.ne.s32.totalorder %s41, %s42
      %p53 = scmp.eq.s32.totalorder %s21, 0
      %p54 = por %p52, %p53
      %p55 = scmp.ne.s32.totalorder %s41, %s42
      %p56 = scmp.eq.s32.totalorder %s22, 3
      %p57 = por %p55, %p56
      %p59 = scmp.ne.s32.totalorder %s42, %s58
      %p60 = scmp.eq.s32.totalorder %s22, 0
      %p61 = por %p59, %p60
      %s62 = ssub.s32 %s24, %s31
      %p63 = scmp.eq.s32.totalorder %s62, 0
      %s65 = sadd.s32 %s64, 1
      %s66 = scalar_select %p63, %s64, %s65
      %p69 = pneg %p63
      %p70 = scmp.eq.s32.totalorder %s16, 3
      %p71 = por %p69, %p70
      %p72 = scmp.ne.s32.totalorder %s64, %s67
      %p73 = scmp.eq.s32.totalorder %s16, 0
      %p74 = por %p72, %p73
      %p75 = scmp.ne.s32.totalorder %s64, %s67
      %p76 = scmp.eq.s32.totalorder %s21, 3
      %p77 = por %p75, %p76
      %p78 = scmp.ne.s32.totalorder %s67, %s68
      %p79 = scmp.eq.s32.totalorder %s21, 0
      %p80 = por %p78, %p79
      %p81 = scmp.ne.s32.totalorder %s67, %s68
      %p82 = scmp.eq.s32.totalorder %s22, 3
      %p83 = por %p81, %p82
      %p85 = scmp.ne.s32.totalorder %s68, %s84
      %p86 = scmp.eq.s32.totalorder %s22, 0
      %p87 = por %p85, %p86
      %s88 = ssub.s32 %s24, %s31
      %p89 = scmp.eq.s32.totalorder %s88, 0
      %s91 = sadd.s32 %s90, 1
      %s92 = scalar_select %p89, %s90, %s91
      %p95 = pneg %p89
      %p96 = scmp.eq.s32.totalorder %s16, 3
      %p97 = por %p95, %p96
      %p98 = scmp.ne.s32.totalorder %s90, %s93
      %p99 = scmp.eq.s32.totalorder %s16, 0
      %p100 = por %p98, %p99
      %p101 = scmp.ne.s32.totalorder %s90, %s93
      %p102 = scmp.eq.s32.totalorder %s21, 3
      %p103 = por %p101, %p102
      %p104 = scmp.ne.s32.totalorder %s93, %s94
      %p105 = scmp.eq.s32.totalorder %s21, 0
      %p106 = por %p104, %p105
      %p107 = scmp.ne.s32.totalorder %s93, %s94
      %p108 = scmp.eq.s32.totalorder %s22, 3
      %p109 = por %p107, %p108
      %p111 = scmp.ne.s32.totalorder %s94, %s110
      %p112 = scmp.eq.s32.totalorder %s22, 0
      %p113 = por %p111, %p112
      %s114 = ssub.s32 %s23, %s35
      %s115 = ssub.s32 %s24, %s31
      %s116 = sor.u32 %s114, %s115
      %p117 = scmp.eq.s32.totalorder %s116, 0
      %s119 = sadd.s32 %s118, 1
      %s120 = scalar_select %p117, %s118, %s119
      %p123 = pneg %p117
      %p124 = scmp.eq.s32.totalorder %s16, 3
      %p125 = por %p123, %p124
      %p126 = scmp.ne.s32.totalorder %s118, %s121
      %p127 = scmp.eq.s32.totalorder %s16, 0
      %p128 = por %p126, %p127
      %p129 = scmp.ne.s32.totalorder %s118, %s121
      %p130 = scmp.eq.s32.totalorder %s21, 3
      %p131 = por %p129, %p130
      %p132 = scmp.ne.s32.totalorder %s121, %s122
      %p133 = scmp.eq.s32.totalorder %s21, 0
      %p134 = por %p132, %p133
      %p135 = scmp.ne.s32.totalorder %s121, %s122
      %p136 = scmp.eq.s32.totalorder %s22, 3
      %p137 = por %p135, %p136
      %p139 = scmp.ne.s32.totalorder %s122, %s138
      %p140 = scmp.eq.s32.totalorder %s22, 0
      %p141 = por %p139, %p140
      %p142 = scmp.le.s32.totalorder 1, %s16
      %p143 = scmp.lt.s32.totalorder %s16, 5
      %p144 = pnand %p142, %p143
      %p145 = pneg %p144
      // Predicated region
      $region9: #{linear_pallas.1} parent=5 // pred_check
        _
      $region10: #{linear_pallas.1} parent=5 // pred_check_branch
        %147 = sbr.rel (%p144) target = $region12
      $region11: #{linear_pallas.1} parent=5 // pred_region
        %s148 = ssub.s32 %s16, 1
        // Predicated region
        $region13: #{linear_pallas.1} parent=11 // pred_check
          %p149 = pneg %p54
        $region14: #{linear_pallas.1} parent=11 // pred_check_branch
          %151 = sbr.rel (%p149) target = $region16
        $region15: #{linear_pallas.1} parent=11 // pred_region
          %s153 = ssub.s32 64, 64
          %154 = vsyncadd [#allocation3], %s153
          %s155 = smul.addr %s25, 4
          %s156 = smul.addr %s155, 16
          %s157 = scalar_lea.hbm %s0, %s156
          %s159 = sshll.u32 [#allocation2], 4
          %s160 = int_to_ptr.vmem [resolvable:$true] %s159
          %162 = dma.hbm_to_vmem [thread:$0]  %s157, 64, %s160, [#allocation3]
        $region16: #{linear_pallas.1} parent=11 // pred_fallthru
          _
      $region12: #{linear_pallas.1} parent=5 // pred_fallthru
        _
      %p163 = scmp.lt.s32.totalorder %s16, 4
      // Predicated region
      $region17: #{linear_pallas.1} parent=5 // pred_check
        %p164 = pneg %p163
      $region18: #{linear_pallas.1} parent=5 // pred_check_branch
        %166 = sbr.rel (%p164) target = $region20
      $region19: #{linear_pallas.1} parent=5 // pred_region
        // Predicated region
        $region21: #{linear_pallas.1} parent=19 // pred_check
          %p167 = pneg %p74
        $region22: #{linear_pallas.1} parent=19 // pred_check_branch
          %169 = sbr.rel (%p167) target = $region24
        $region23: #{linear_pallas.1} parent=19 // pred_region
          %s170 = sand.u32 %s16, 1
          %s171 = scalar_lea.sflag [#allocation6], %s170
          %s172 = sand.u32 %s64, 1
          %s173 = smul.addr %s172, 880
          %s174 = scalar_lea.vmem [#allocation5], %s173
          %s175 = smul.u32 2, %s24
          %s177 = ssub.s32 14080, 14080
          %178 = vsyncadd %s171, %s177
          %s179 = smul.addr %s175, 128
          %s180 = scalar_lea.hbm %s1, %s179
          %s181 = sshll.u32 %s174, 4
          %s182 = int_to_ptr.vmem [resolvable:$true] %s181
          %187 = dma.hbm_to_vmem [thread:$0]  %s180, 14080, %s182, %s171, 1024, 256, 16
        $region24: #{linear_pallas.1} parent=19 // pred_fallthru
          _
        // Predicated region
        $region25: #{linear_pallas.1} parent=19 // pred_check
          %p188 = pneg %p100
        $region26: #{linear_pallas.1} parent=19 // pred_check_branch
          %190 = sbr.rel (%p188) target = $region28
        $region27: #{linear_pallas.1} parent=19 // pred_region
          %s191 = sand.u32 %s16, 1
          %s192 = scalar_lea.sflag [#allocation6], %s191
          %s193 = sand.u32 %s90, 1
          %s194 = smul.addr %s193, 2
          %s195 = scalar_lea.vmem [#allocation7], %s194
          %s196 = smul.u32 2, %s24
          %s198 = ssub.s32 32, 32
          %199 = vsyncadd %s192, %s198
          %s200 = smul.addr %s196, 16
          %s201 = scalar_lea.hbm %s2, %s200
          %s203 = sshll.u32 %s195, 4
          %s204 = int_to_ptr.vmem [resolvable:$true] %s203
          %206 = dma.hbm_to_vmem [thread:$0]  %s201, 32, %s204, %s192
        $region28: #{linear_pallas.1} parent=19 // pred_fallthru
          _
      $region20: #{linear_pallas.1} parent=5 // pred_fallthru
        _
      %p207 = scmp.le.s32.totalorder 1, %s16
      %p208 = scmp.lt.s32.totalorder %s16, 5
      %p209 = pnand %p207, %p208
      %p210 = pneg %p209
      // Predicated region
      $region29: #{linear_pallas.1} parent=5 // pred_check
        _
      $region30: #{linear_pallas.1} parent=5 // pred_check_branch
        %212 = sbr.rel (%p209) target = $region32
      $region31: #{linear_pallas.1} parent=5 // pred_region
        %s213 = ssub.s32 %s16, 1
        // Predicated region
        $region33: #{linear_pallas.1} parent=31 // pred_check
          %p214 = pneg %p54
        $region34: #{linear_pallas.1} parent=31 // pred_check_branch
          %216 = sbr.rel (%p214) target = $region36
        $region35: #{linear_pallas.1} parent=31 // pred_region
          %217 = dma.done [#allocation3], 64
        $region36: #{linear_pallas.1} parent=31 // pred_fallthru
          _
        %s218 = sand.u32 %s21, 1
        %s219 = scalar_lea.sflag [#allocation6], %s218
        %s220 = sand.u32 %s67, 1
        %s221 = smul.addr %s220, 880
        %s222 = scalar_lea.vmem [#allocation5], %s221
        // Predicated region
        $region37: #{linear_pallas.1} parent=31 // pred_check
          %p223 = pneg %p80
        $region38: #{linear_pallas.1} parent=31 // pred_check_branch
          %225 = sbr.rel (%p223) target = $region40
        $region39: #{linear_pallas.1} parent=31 // pred_region
          %226 = dma.done %s219, 14080
        $region40: #{linear_pallas.1} parent=31 // pred_fallthru
          _
        %s227 = sand.u32 %s21, 1
        %s228 = scalar_lea.sflag [#allocation6], %s227
        %s229 = sand.u32 %s93, 1
        %s230 = smul.addr %s229, 2
        %s231 = scalar_lea.vmem [#allocation7], %s230
        // Predicated region
        $region41: #{linear_pallas.1} parent=31 // pred_check
          %p232 = pneg %p106
        $region42: #{linear_pallas.1} parent=31 // pred_check_branch
          %234 = sbr.rel (%p232) target = $region44
        $region43: #{linear_pallas.1} parent=31 // pred_region
          %235 = dma.done %s228, 32
        $region44: #{linear_pallas.1} parent=31 // pred_fallthru
          _
        %p236 = pneg %p54
        %p237 = pneg %p51
        %s238 = sand.u32 %s21, 1
        %s239 = scalar_lea.sflag [#allocation6], %s238
        %s240 = sand.u32 %s67, 1
        %s241 = smul.addr %s240, 880
        %s242 = scalar_lea.vmem [#allocation5], %s241
        %p243 = pneg %p80
        %p244 = pneg %p77
        %s245 = sand.u32 %s21, 1
        %s246 = scalar_lea.sflag [#allocation6], %s245
        %s247 = sand.u32 %s93, 1
        %s248 = smul.addr %s247, 2
        %s249 = scalar_lea.vmem [#allocation7], %s248
        %p250 = pneg %p106
        %p251 = pneg %p103
        %p252 = pneg %p134
        %p253 = pneg %p131
        %s254 = sand.u32 %s121, 1
        %s255 = scalar_lea.sflag [#allocation4], %s254
        %s256 = sand.u32 %s121, 1
        %s257 = smul.addr %s256, 2
        %s258 = scalar_lea.vmem [#allocation8], %s257
        %s259 = smul.u32 2, %s26
        %s260 = smul.u32 2, %s26
        %s261 = smul.u32 2, %s26
        %v262 = vld [vmem:[#allocation2] sm:$0xf]
        %v263 = vld [vmem:[%s222] sm:$0xff]
        %v264 = vld [vmem:[%s222 + $0x8] sm:$0xff]
        %v265 = vld [vmem:[%s222 + $0x10] sm:$0xff]
        %v266 = vld [vmem:[%s222 + $0x18] sm:$0xff]
        %v267 = vld [vmem:[%s222 + $0x20] sm:$0xff]
        %v268 = vld [vmem:[%s222 + $0x28] sm:$0xff]
        %v269 = vld [vmem:[%s222 + $0x30] sm:$0xff]
        %v270 = vld [vmem:[%s222 + $0x38] sm:$0xff]
        %v271 = vld [vmem:[%s222 + $0x40] sm:$0xff]
        %v272 = vld [vmem:[%s222 + $0x48] sm:$0xff]
        %v273 = vld [vmem:[%s222 + $0x50] sm:$0xff]
        %v274 = vld [vmem:[%s222 + $0x58] sm:$0xff]
        %v275 = vld [vmem:[%s222 + $0x60] sm:$0xff]
        %v276 = vld [vmem:[%s222 + $0x68] sm:$0xff]
        %v277 = vld [vmem:[%s222 + $0x70] sm:$0xff]
        %v278 = vld [vmem:[%s222 + $0x78] sm:$0xff]
        %v279 = vld [vmem:[%s222 + $0x80] sm:$0xff]
        %v280 = vld [vmem:[%s222 + $0x88] sm:$0xff]
        %v281 = vld [vmem:[%s222 + $0x90] sm:$0xff]
        %v282 = vld [vmem:[%s222 + $0x98] sm:$0xff]
        %v283 = vld [vmem:[%s222 + $0xa0] sm:$0xff]
        %v284 = vld [vmem:[%s222 + $0xa8] sm:$0xff]
        %v285 = vld [vmem:[%s222 + $0xb0] sm:$0xff]
        %v286 = vld [vmem:[%s222 + $0xb8] sm:$0xff]
        %v287 = vld [vmem:[%s222 + $0xc0] sm:$0xff]
        %v288 = vld [vmem:[%s222 + $0xc8] sm:$0xff]
        %v289 = vld [vmem:[%s222 + $0xd0] sm:$0xff]
        %v290 = vld [vmem:[%s222 + $0xd8] sm:$0xff]
        %v291 = vld [vmem:[%s222 + $0xe0] sm:$0xff]
        %v292 = vld [vmem:[%s222 + $0xe8] sm:$0xff]
        %v293 = vld [vmem:[%s222 + $0xf0] sm:$0xff]
        %v294 = vld [vmem:[%s222 + $0xf8] sm:$0xff]
        %v295 = vld [vmem:[%s222 + $0x100] sm:$0xff]
        %v296 = vld [vmem:[%s222 + $0x108] sm:$0xff]
        %v297 = vld [vmem:[%s222 + $0x110] sm:$0xff]
        %v298 = vld [vmem:[%s222 + $0x118] sm:$0xff]
        %v299 = vld [vmem:[%s222 + $0x120] sm:$0xff]
        %v300 = vld [vmem:[%s222 + $0x128] sm:$0xff]
        %v301 = vld [vmem:[%s222 + $0x130] sm:$0xff]
        %v302 = vld [vmem:[%s222 + $0x138] sm:$0xff]
        %v303 = vld [vmem:[%s222 + $0x140] sm:$0xff]
        %v304 = vld [vmem:[%s222 + $0x148] sm:$0xff]
        %v305 = vld [vmem:[%s222 + $0x150] sm:$0xff]
        %v306 = vld [vmem:[%s222 + $0x158] sm:$0xff]
        %v307 = vld [vmem:[%s222 + $0x160] sm:$0xff]
        %v308 = vld [vmem:[%s222 + $0x168] sm:$0xff]
        %v309 = vld [vmem:[%s222 + $0x170] sm:$0xff]
        %v310 = vld [vmem:[%s222 + $0x178] sm:$0xff]
        %v311 = vld [vmem:[%s222 + $0x180] sm:$0xff]
        %v312 = vld [vmem:[%s222 + $0x188] sm:$0xff]
        %v313 = vld [vmem:[%s222 + $0x190] sm:$0xff]
        %v314 = vld [vmem:[%s222 + $0x198] sm:$0xff]
        %v315 = vld [vmem:[%s222 + $0x1a0] sm:$0xff]
        %v316 = vld [vmem:[%s222 + $0x1a8] sm:$0xff]
        %v317 = vld [vmem:[%s222 + $0x1b0] sm:$0xff]
        %v318 = vld [vmem:[%s222 + $0x1b8] sm:$0xff]
        %v319 = vld [vmem:[%s222 + $0x1c0] sm:$0xff]
        %v320 = vld [vmem:[%s222 + $0x1c8] sm:$0xff]
        %v321 = vld [vmem:[%s222 + $0x1d0] sm:$0xff]
        %v322 = vld [vmem:[%s222 + $0x1d8] sm:$0xff]
        %v323 = vld [vmem:[%s222 + $0x1e0] sm:$0xff]
        %v324 = vld [vmem:[%s222 + $0x1e8] sm:$0xff]
        %v325 = vld [vmem:[%s222 + $0x1f0] sm:$0xff]
        %v326 = vld [vmem:[%s222 + $0x1f8] sm:$0xff]
        %v327 = vld [vmem:[%s222 + $0x200] sm:$0xff]
        %v328 = vld [vmem:[%s222 + $0x208] sm:$0xff]
        %v329 = vld [vmem:[%s222 + $0x210] sm:$0xff]
        %v330 = vld [vmem:[%s222 + $0x218] sm:$0xff]
        %v331 = vld [vmem:[%s222 + $0x220] sm:$0xff]
        %v332 = vld [vmem:[%s222 + $0x228] sm:$0xff]
        %v333 = vld [vmem:[%s222 + $0x230] sm:$0xff]
        %v334 = vld [vmem:[%s222 + $0x238] sm:$0xff]
        %v335 = vld [vmem:[%s222 + $0x240] sm:$0xff]
        %v336 = vld [vmem:[%s222 + $0x248] sm:$0xff]
        %v337 = vld [vmem:[%s222 + $0x250] sm:$0xff]
        %v338 = vld [vmem:[%s222 + $0x258] sm:$0xff]
        %v339 = vld [vmem:[%s222 + $0x260] sm:$0xff]
        %v340 = vld [vmem:[%s222 + $0x268] sm:$0xff]
        %v341 = vld [vmem:[%s222 + $0x270] sm:$0xff]
        %v342 = vld [vmem:[%s222 + $0x278] sm:$0xff]
        %v343 = vld [vmem:[%s222 + $0x280] sm:$0xff]
        %v344 = vld [vmem:[%s222 + $0x288] sm:$0xff]
        %v345 = vld [vmem:[%s222 + $0x290] sm:$0xff]
        %v346 = vld [vmem:[%s222 + $0x298] sm:$0xff]
        %v347 = vld [vmem:[%s222 + $0x2a0] sm:$0xff]
        %v348 = vld [vmem:[%s222 + $0x2a8] sm:$0xff]
        %v349 = vld [vmem:[%s222 + $0x2b0] sm:$0xff]
        %v350 = vld [vmem:[%s222 + $0x2b8] sm:$0xff]
        %v351 = vld [vmem:[%s222 + $0x2c0] sm:$0xff]
        %v352 = vld [vmem:[%s222 + $0x2c8] sm:$0xff]
        %v353 = vld [vmem:[%s222 + $0x2d0] sm:$0xff]
        %v354 = vld [vmem:[%s222 + $0x2d8] sm:$0xff]
        %v355 = vld [vmem:[%s222 + $0x2e0] sm:$0xff]
        %v356 = vld [vmem:[%s222 + $0x2e8] sm:$0xff]
        %v357 = vld [vmem:[%s222 + $0x2f0] sm:$0xff]
        %v358 = vld [vmem:[%s222 + $0x2f8] sm:$0xff]
        %v359 = vld [vmem:[%s222 + $0x300] sm:$0xff]
        %v360 = vld [vmem:[%s222 + $0x308] sm:$0xff]
        %v361 = vld [vmem:[%s222 + $0x310] sm:$0xff]
        %v362 = vld [vmem:[%s222 + $0x318] sm:$0xff]
        %v363 = vld [vmem:[%s222 + $0x320] sm:$0xff]
        %v364 = vld [vmem:[%s222 + $0x328] sm:$0xff]
        %v365 = vld [vmem:[%s222 + $0x330] sm:$0xff]
        %v366 = vld [vmem:[%s222 + $0x338] sm:$0xff]
        %v367 = vld [vmem:[%s222 + $0x340] sm:$0xff]
        %v368 = vld [vmem:[%s222 + $0x348] sm:$0xff]
        %v369 = vld [vmem:[%s222 + $0x350] sm:$0xff]
        %v370 = vld [vmem:[%s222 + $0x358] sm:$0xff]
        %v371 = vld [vmem:[%s222 + $0x360] sm:$0xff]
        %v372 = vld [vmem:[%s222 + $0x368] sm:$0xff]
        %v373 = vld [vmem:[%s231] sm:$0x3]
        %v375 = vlaneseq
        %v376 = vshrl.u32 %v375, 7
        %v377 = vsub.s32 0, %v376
        %v378 = vrot.slane %v262, %v377
        %v379 = vlaneseq
        %v380 = vshrl.u32 %v379, 7
        %v381 = vsub.s32 1, %v380
        %v382 = vrot.slane %v262, %v381
        %v383 = vlaneseq
        %v384 = vshrl.u32 %v383, 7
        %v385 = vsub.s32 2, %v384
        %v386 = vrot.slane %v262, %v385
        %v387 = vlaneseq
        %v388 = vshrl.u32 %v387, 7
        %v389 = vsub.s32 3, %v388
        %v390 = vrot.slane %v262, %v389
        %v395 = vlaneseq
        %v396 = vshrl.u32 %v395, 7
        %v397 = vsub.s32 0, %v396
        %v398 = vrot.slane %v373, %v397
        %v399 = vlaneseq
        %v400 = vshrl.u32 %v399, 7
        %v401 = vsub.s32 1, %v400
        %v402 = vrot.slane %v373, %v401
        %vm405 = vcmask 457728
        %v406 = vsel %vm405, %v390, 0
        %408 = vmatprep.subr.mxu0 %v264
        %409 = vmatpush1.msra.mxu0 %v263
        %410 = vmatprep.subr.mxu0 %v266
        %411 = vmatpush1.msra.mxu0 %v265
        %412 = vmatprep.subr.mxu0 %v268
        %413 = vmatpush1.msra.mxu0 %v267
        %414 = vmatprep.subr.mxu0 %v270
        %415 = vmatpush1.msra.mxu0 %v269
        %416 = vmatprep.subr.mxu0 %v272
        %417 = vmatpush1.msra.mxu0 %v271
        %418 = vmatprep.subr.mxu0 %v274
        %419 = vmatpush1.msra.mxu0 %v273
        %420 = vmatprep.subr.mxu0 %v276
        %421 = vmatpush1.msra.mxu0 %v275
        %422 = vmatprep.subr.mxu0 %v278
        %423 = vmatpush1.msra.mxu0 %v277
        %424 = vmatprep.subr.mxu0 %v280
        %425 = vmatpush1.msra.mxu0 %v279
        %426 = vmatprep.subr.mxu0 %v282
        %427 = vmatpush1.msra.mxu0 %v281
        %428 = vmatprep.subr.mxu0 %v284
        %429 = vmatpush1.msra.mxu0 %v283
        %430 = vmatprep.subr.mxu0 %v286
        %431 = vmatpush1.msra.mxu0 %v285
        %432 = vmatprep.subr.mxu0 %v288
        %433 = vmatpush1.msra.mxu0 %v287
        %434 = vmatprep.subr.mxu0 %v290
        %435 = vmatpush1.msra.mxu0 %v289
        %436 = vmatprep.subr.mxu0 %v292
        %437 = vmatpush1.msra.mxu0 %v291
        %438 = vmatprep.subr.mxu0 %v294
        %439 = vmatpush1.msra.mxu0 %v293
        %440 = vmatprep.subr.mxu0 %v296
        %441 = vmatpush1.msra.mxu0 %v295
        %442 = vmatprep.subr.mxu0 %v298
        %443 = vmatpush1.msra.mxu0 %v297
        %444 = vmatprep.subr.mxu0 %v300
        %445 = vmatpush1.msra.mxu0 %v299
        %446 = vmatprep.subr.mxu0 %v302
        %447 = vmatpush1.msra.mxu0 %v301
        %448 = vmatprep.subr.mxu0 %v304
        %449 = vmatpush1.msra.mxu0 %v303
        %450 = vmatprep.subr.mxu0 %v306
        %451 = vmatpush1.msra.mxu0 %v305
        %452 = vmatprep.subr.mxu0 %v308
        %453 = vmatpush1.msra.mxu0 %v307
        %454 = vmatprep.subr.mxu0 %v310
        %455 = vmatpush1.msra.mxu0 %v309
        %456 = vmatprep.subr.mxu0 %v312
        %457 = vmatpush1.msra.mxu0 %v311
        %458 = vmatprep.subr.mxu0 %v314
        %459 = vmatpush1.msra.mxu0 %v313
        %460 = vmatprep.subr.mxu0 %v316
        %461 = vmatpush1.msra.mxu0 %v315
        %462 = vmatprep.subr.mxu0 %v318
        %463 = vmatpush1.msra.mxu0 %v317
        %464 = vmatprep.subr.mxu0 %v320
        %465 = vmatpush1.msra.mxu0 %v319
        %466 = vmatprep.subr.mxu0 %v322
        %467 = vmatpush1.msra.mxu0 %v321
        %468 = vmatprep.subr.mxu0 %v324
        %469 = vmatpush1.msra.mxu0 %v323
        %470 = vmatprep.subr.mxu0 %v326
        %471 = vmatpush1.msra.mxu0 %v325
        %472 = vmatprep.mubr.f32.mxu0 %v382
        %473 = vmatmul.mubr.f32.gmra.mrb[0].mxu0 %v378
        %v474 = vpop.f32.mrb[0].mxu0
        %v475 = vadd.f32 %v398, %v474
        %v476 = vpop.f32.mrb[0].mxu0
        %v477 = vadd.f32 %v402, %v476
        %478 = vdwg.mxu0
        %479 = vmatprep.subr.mxu0 %v328
        %480 = vmatpush1.msra.mxu0 %v327
        %481 = vmatprep.subr.mxu0 %v330
        %482 = vmatpush1.msra.mxu0 %v329
        %483 = vmatprep.subr.mxu0 %v332
        %484 = vmatpush1.msra.mxu0 %v331
        %485 = vmatprep.subr.mxu0 %v334
        %486 = vmatpush1.msra.mxu0 %v333
        %487 = vmatprep.subr.mxu0 %v336
        %488 = vmatpush1.msra.mxu0 %v335
        %489 = vmatprep.subr.mxu0 %v338
        %490 = vmatpush1.msra.mxu0 %v337
        %491 = vmatprep.subr.mxu0 %v340
        %492 = vmatpush1.msra.mxu0 %v339
        %493 = vmatprep.subr.mxu0 %v342
        %494 = vmatpush1.msra.mxu0 %v341
        %495 = vmatprep.subr.mxu0 %v344
        %496 = vmatpush1.msra.mxu0 %v343
        %497 = vmatprep.subr.mxu0 %v346
        %498 = vmatpush1.msra.mxu0 %v345
        %499 = vmatprep.subr.mxu0 %v348
        %500 = vmatpush1.msra.mxu0 %v347
        %501 = vmatprep.subr.mxu0 %v350
        %502 = vmatpush1.msra.mxu0 %v349
        %503 = vmatprep.subr.mxu0 %v352
        %504 = vmatpush1.msra.mxu0 %v351
        %505 = vmatprep.subr.mxu0 %v354
        %506 = vmatpush1.msra.mxu0 %v353
        %507 = vmatprep.subr.mxu0 %v356
        %508 = vmatpush1.msra.mxu0 %v355
        %509 = vmatprep.subr.mxu0 %v358
        %510 = vmatpush1.msra.mxu0 %v357
        %511 = vmatprep.subr.mxu0 %v360
        %512 = vmatpush1.msra.mxu0 %v359
        %513 = vmatprep.subr.mxu0 %v362
        %514 = vmatpush1.msra.mxu0 %v361
        %515 = vmatprep.subr.mxu0 %v364
        %516 = vmatpush1.msra.mxu0 %v363
        %517 = vmatprep.subr.mxu0 %v366
        %518 = vmatpush1.msra.mxu0 %v365
        %519 = vmatprep.subr.mxu0 %v368
        %520 = vmatpush1.msra.mxu0 %v367
        %521 = vmatprep.subr.mxu0 %v370
        %522 = vmatpush1.msra.mxu0 %v369
        %523 = vmatprep.subr.mxu0 %v372
        %524 = vmatpush1.msra.mxu0 %v371
        %525 = vmatprep.subr.mxu0 0.0
        %526 = vmatpush1.msra.mxu0 0.0
        %527 = vmatprep.subr.mxu0 0.0
        %528 = vmatpush1.msra.mxu0 0.0
        %529 = vmatprep.subr.mxu0 0.0
        %530 = vmatpush1.msra.mxu0 0.0
        %531 = vmatprep.subr.mxu0 0.0
        %532 = vmatpush1.msra.mxu0 0.0
        %533 = vmatprep.subr.mxu0 0.0
        %534 = vmatpush1.msra.mxu0 0.0
        %535 = vmatprep.subr.mxu0 0.0
        %536 = vmatpush1.msra.mxu0 0.0
        %537 = vmatprep.subr.mxu0 0.0
        %538 = vmatpush1.msra.mxu0 0.0
        %539 = vmatprep.subr.mxu0 0.0
        %540 = vmatpush1.msra.mxu0 0.0
        %541 = vmatprep.subr.mxu0 0.0
        %542 = vmatpush1.msra.mxu0 0.0
        %543 = vmatprep.mubr.f32.mxu0 %v406
        %544 = vmatmul.mubr.f32.gmra.mrb[0].mxu0 %v386
        %v545 = vpop.f32.mrb[0].mxu0
        %v546 = vadd.f32 %v475, %v545
        %v547 = vpop.f32.mrb[0].mxu0
        %v548 = vadd.f32 %v477, %v547
        %549 = vdwg.mxu0
        %v552 = vcombine.low %v546, %v548
        %v554 = vunpack.c.l.s4 1966171168
        %v555 = vunpack.c.0.s8 %v554
        %v556 = vlaneseq
        %v557 = vshrl.u32 %v556, 7
        %v558 = vsub.s32 %v555, %v557
        %v559 = vrot.slane %v552, %v558
        %v561 = vunpack.c.l.s4 1966171168
        %v562 = vunpack.c.0.s8 %v561
        %v563 = vlaneseq
        %v564 = vshrl.u32 %v563, 7
        %v565 = vsub.s32 %v562, %v564
        %v566 = vrot.slane %v559, %v565
        %v568 = vlaneseq
        %vm569 = vcmp.ge.s32.totalorder %v568, 0
        %vm570 = vcmp.lt.s32.totalorder %v568, 256
        %vm571 = vmand %vm569, %vm570
        %572 = vst.msk [vmem:[%s258] sm:$0x3] %vm571, %v566
        %s573 = sand.u32 %s121, 1
        %s574 = scalar_lea.sflag [#allocation4], %s573
        %s575 = sand.u32 %s121, 1
        %s576 = smul.addr %s575, 2
        %s577 = scalar_lea.vmem [#allocation8], %s576
        // Predicated region
        $region45: #{linear_pallas.1} parent=31 // pred_check
          %p578 = pneg %p131
        $region46: #{linear_pallas.1} parent=31 // pred_check_branch
          %580 = sbr.rel (%p578) target = $region48
        $region47: #{linear_pallas.1} parent=31 // pred_region
          %s581 = smul.u32 2, %s26
          %s583 = ssub.s32 32, 32
          %584 = vsyncadd %s574, %s583
          %s585 = smul.addr %s25, 8
          %s586 = sadd.s32 %s581, %s585
          %s587 = smul.addr %s586, 16
          %s588 = scalar_lea.hbm %s3, %s587
          %s590 = sshll.u32 %s577, 4
          %s591 = int_to_ptr.vmem [resolvable:$true] %s590
          %593 = dma.vmem_to_hbm [thread:$0]  %s591, 32, %s588, %s574
        $region48: #{linear_pallas.1} parent=31 // pred_fallthru
          _
      $region32: #{linear_pallas.1} parent=5 // pred_fallthru
        _
      %p594 = scmp.le.s32.totalorder 2, %s16
      // Predicated region
      $region49: #{linear_pallas.1} parent=5 // pred_check
        %p595 = pneg %p594
      $region50: #{linear_pallas.1} parent=5 // pred_check_branch
        %597 = sbr.rel (%p595) target = $region52
      $region51: #{linear_pallas.1} parent=5 // pred_region
        %s598 = ssub.s32 %s16, 2
        // Predicated region
        $region53: #{linear_pallas.1} parent=51 // pred_check
          %p599 = pneg %p137
        $region54: #{linear_pallas.1} parent=51 // pred_check_branch
          %601 = sbr.rel (%p599) target = $region56
        $region55: #{linear_pallas.1} parent=51 // pred_region
          %s602 = sand.u32 %s122, 1
          %s603 = scalar_lea.sflag [#allocation4], %s602
          %s604 = sand.u32 %s122, 1
          %s605 = smul.addr %s604, 2
          %s606 = scalar_lea.vmem [#allocation8], %s605
          %607 = dma.done %s603, 32
        $region56: #{linear_pallas.1} parent=51 // pred_fallthru
          _
      $region52: #{linear_pallas.1} parent=5 // pred_fallthru
        _
    $region6: #{linear_pallas.1} parent=1 // loop_footer
      %s20 = sadd.s32 1, %s16
    $region7: #{linear_pallas.1} parent=1 // loop_footer_branch
      %15 = sbr.rel target = $region3
    $region8: #{linear_pallas.1} parent=1 // loop_exit
      _
    %608 = vsyncpa [#allocation3], 1
    %s609 = scalar_lea.sflag [#allocation3], 1
    %610 = vsyncpa %s609, 1
    %611 = vsyncpa [#allocation6], 1
    %s612 = scalar_lea.sflag [#allocation6], 1
    %613 = vsyncpa %s612, 1
    %614 = vsyncpa [#allocation4], 1
    %s615 = scalar_lea.sflag [#allocation4], 1
    %616 = vsyncpa %s615, 1

</llo_original>
